<compile_context>
chip_gen: v7x
topology: tpu7x:2x2x1
jax: 0.10.0
libtpu: 0.0.40
codegen_flags: <defaults>
</compile_context>

<pallas_src>
import jax
import jax.numpy as jnp
from jax import lax
from jax.experimental import pallas as pl
from jax.experimental.pallas import tpu as pltpu

B, H, C = 2, 32, 4          # batch, input_size (aggregation width), num_class
SLAB_ROWS, SLAB_COLS = 8, 128   # one full vreg tile: lane-dense output block


def head_kernel(x_ref, w_ref, lbl_ref, out_ref):
    # x_ref   : VMEM (B, H+1) f32  -- aggregation with a ones column (bias fold)
    # w_ref   : VMEM (H+1, C) f32  -- Linear weight^T with bias appended as last row
    # lbl_ref : VMEM (B, 1)  int32
    # out_ref : VMEM (8, 128) f32  -- packed slab: probs | pred(bitcast) | loss
    b, _ = x_ref.shape
    c = w_ref.shape[1]

    # TODO(synk): nn.Dropout(0.1) is active only in training; eval-mode forward
    # is the identity, so it is omitted here.
    x = x_ref[...]                                                  # (B, H+1)

    # Linear head (bias folded in): single MXU matmul over the whole batch.
    logits = jnp.dot(x, w_ref[...],
                     preferred_element_type=jnp.float32)            # (B, C)

    # Numerically-stable softmax / log-softmax (shared exponentials).
    mx = jnp.max(logits, axis=-1, keepdims=True)                    # (B, 1)
    z = logits - mx
    ez = jnp.exp(z)
    se = jnp.sum(ez, axis=-1, keepdims=True)                        # (B, 1)
    probs = ez / se                                                 # exact softmax
    log_probs = z - jnp.log(se)                                     # (B, C)

    cls_iota = lax.broadcasted_iota(jnp.int32, (b, c), 1)           # (B, C)

    # argmax with smallest-index tie-break; reuse `mx` (no second reduction).
    is_max = logits == mx
    pred = jnp.min(jnp.where(is_max, cls_iota, c),
                   axis=-1, keepdims=True).astype(jnp.int32)        # (B, 1)

    # Cross-entropy (mean over batch): one vectorized compare builds the one-hot.
    onehot = (cls_iota == lbl_ref[...]).astype(jnp.float32)         # (B, C)
    picked = jnp.sum(onehot * log_probs, axis=-1, keepdims=True)    # (B, 1)
    loss = jnp.sum(-picked, axis=0, keepdims=True) * (1.0 / b)      # (1, 1)

    # Pack everything into one lane-dense (8, 128) slab -> single writeback DMA.
    out_ref[...] = jnp.zeros((SLAB_ROWS, SLAB_COLS), jnp.float32)
    out_ref[0:b, 0:c] = probs
    out_ref[0:b, c:c + 1] = pltpu.bitcast(pred, jnp.float32)        # exact int32 bits
    out_ref[0:1, c + 1:c + 2] = loss


def classification_head(aggregation, label, weight, bias):
    """aggregation: (B,H) f32, label: (B,) int, weight: (H,C) f32, bias: (1,C) f32.

    `weight` is the transposed PyTorch Linear weight (Linear stores (C,H) and
    computes x @ W.T + b); callers with raw PyTorch params must transpose.
    """
    b, h = aggregation.shape
    c = weight.shape[1]

    # Fold bias into the matmul: x_aug = [x | 1], w_aug = [[W],[b]].
    x_aug = jnp.concatenate(
        [aggregation, jnp.ones((b, 1), aggregation.dtype)], axis=1)      # (B, H+1)
    w_aug = jnp.concatenate([weight, bias.reshape(1, c)], axis=0)        # (H+1, C)
    lbl = label.astype(jnp.int32).reshape(b, 1)                          # (B, 1)

    slab = pl.pallas_call(
        head_kernel,
        out_shape=jax.ShapeDtypeStruct((SLAB_ROWS, SLAB_COLS), jnp.float32),
        in_specs=[
            pl.BlockSpec(memory_space=pltpu.MemorySpace.VMEM),   # x_aug
            pl.BlockSpec(memory_space=pltpu.MemorySpace.VMEM),   # w_aug
            pl.BlockSpec(memory_space=pltpu.MemorySpace.VMEM),   # label (B,1) int32
        ],
        out_specs=pl.BlockSpec(memory_space=pltpu.MemorySpace.VMEM),
    )(x_aug, w_aug, lbl)

    probs = slab[:b, :c]                                                 # (B, C)
    pred = lax.bitcast_convert_type(slab[:b, c], jnp.int32)              # (B,)
    loss = slab[0, c + 1]                                                # scalar
    return loss, pred, probs


if __name__ == "__main__":
    key = jax.random.PRNGKey(0)
    k_x, k_lbl, k_w = jax.random.split(key, 3)

    # Deterministic small inputs consistent with the module's forward signature.
    aggregation = jax.random.normal(k_x, (B, H), dtype=jnp.float32)
    label = jax.random.randint(k_lbl, (B,), 0, C, dtype=jnp.int32)
    # PyTorch Linear stores (out,in) and computes x @ W.T + b; we keep W.T directly.
    weight = (0.02 * jax.random.normal(k_w, (H, C))).astype(jnp.float32)
    bias = jnp.zeros((1, C), jnp.float32)

    loss, pred, probs = jax.jit(classification_head)(aggregation, label, weight, bias)
    jax.block_until_ready((loss, pred, probs))
    print("KERNEL_OK")
</pallas_src>

<mosaic_0001>
module attributes {stable_mosaic.version = 11 : i64} {
  func.func @head_kernel(%arg0: memref<2x33xf32, #tpu.memory_space<vmem>>, %arg1: memref<33x4xf32, #tpu.memory_space<vmem>>, %arg2: memref<2x1xi32, #tpu.memory_space<vmem>>, %arg3: memref<8x128xf32, #tpu.memory_space<vmem>>) attributes {dimension_semantics = [], scalar_prefetch = 0 : i64, scratch_operands = 0 : i64, tpu.core_type = #tpu.core_type<tc>} {
    %c0 = arith.constant 0 : index
    %c0_0 = arith.constant 0 : index
    %0 = vector.load %arg0[%c0, %c0_0] : memref<2x33xf32, #tpu.memory_space<vmem>>, vector<2x33xf32>
    %c0_1 = arith.constant 0 : index
    %c0_2 = arith.constant 0 : index
    %1 = vector.load %arg1[%c0_1, %c0_2] : memref<33x4xf32, #tpu.memory_space<vmem>>, vector<33x4xf32>
    %cst = arith.constant dense<0.000000e+00> : vector<2x4xf32>
    %2 = tpu.matmul %0, %1, %cst {dimension_numbers = #tpu.dot_dimension_numbers<[1], [0], [0], [1], [0, 0, 1, 1], [], []>} : vector<2x33xf32>, vector<33x4xf32>, vector<2x4xf32> -> vector<2x4xf32>
    %cst_3 = arith.constant dense<0xFF800000> : vector<2xf32>
    %3 = vector.multi_reduction <maximumf>, %2, %cst_3 [1] : vector<2x4xf32> to vector<2xf32>
    %4 = vector.shape_cast %3 : vector<2xf32> to vector<2x1xf32>
    %5 = vector.broadcast %4 : vector<2x1xf32> to vector<2x4xf32>
    %6 = arith.subf %2, %5 : vector<2x4xf32>
    %7 = math.exp %6 : vector<2x4xf32>
    %cst_4 = arith.constant dense<0.000000e+00> : vector<2xf32>
    %8 = vector.multi_reduction <add>, %7, %cst_4 [1] : vector<2x4xf32> to vector<2xf32>
    %9 = vector.shape_cast %8 : vector<2xf32> to vector<2x1xf32>
    %10 = vector.broadcast %9 : vector<2x1xf32> to vector<2x4xf32>
    %11 = arith.divf %7, %10 : vector<2x4xf32>
    %12 = math.log %9 : vector<2x1xf32>
    %13 = vector.broadcast %12 : vector<2x1xf32> to vector<2x4xf32>
    %14 = arith.subf %6, %13 : vector<2x4xf32>
    %15 = tpu.iota {dimensions = array<i32: 1>} : vector<2x4xi32>
    %16 = vector.broadcast %4 : vector<2x1xf32> to vector<2x4xf32>
    %17 = arith.cmpf oeq, %2, %16 : vector<2x4xf32>
    %c4_i32 = arith.constant 4 : i32
    %18 = vector.broadcast %c4_i32 : i32 to vector<2x4xi32>
    %19 = arith.select %17, %15, %18 : vector<2x4xi1>, vector<2x4xi32>
    %cst_5 = arith.constant dense<2147483647> : vector<2xi32>
    %20 = vector.multi_reduction <minsi>, %19, %cst_5 [1] : vector<2x4xi32> to vector<2xi32>
    %21 = vector.shape_cast %20 : vector<2xi32> to vector<2x1xi32>
    %c0_6 = arith.constant 0 : index
    %c0_7 = arith.constant 0 : index
    %22 = vector.load %arg2[%c0_6, %c0_7] : memref<2x1xi32, #tpu.memory_space<vmem>>, vector<2x1xi32>
    %23 = vector.broadcast %22 : vector<2x1xi32> to vector<2x4xi32>
    %24 = arith.cmpi eq, %15, %23 : vector<2x4xi32>
    %25 = arith.extui %24 : vector<2x4xi1> to vector<2x4xi32>
    %26 = arith.sitofp %25 : vector<2x4xi32> to vector<2x4xf32>
    %27 = arith.mulf %26, %14 : vector<2x4xf32>
    %cst_8 = arith.constant dense<0.000000e+00> : vector<2xf32>
    %28 = vector.multi_reduction <add>, %27, %cst_8 [1] : vector<2x4xf32> to vector<2xf32>
    %29 = vector.shape_cast %28 : vector<2xf32> to vector<2x1xf32>
    %cst_9 = arith.constant 0.000000e+00 : f32
    %30 = vector.broadcast %cst_9 : f32 to vector<2x1xf32>
    %31 = arith.subf %30, %29 : vector<2x1xf32>
    %cst_10 = arith.constant dense<0.000000e+00> : vector<1xf32>
    %32 = vector.multi_reduction <add>, %31, %cst_10 [0] : vector<2x1xf32> to vector<1xf32>
    %33 = vector.shape_cast %32 : vector<1xf32> to vector<1x1xf32>
    %cst_11 = arith.constant 5.000000e-01 : f32
    %34 = vector.broadcast %cst_11 : f32 to vector<1x1xf32>
    %35 = arith.mulf %33, %34 : vector<1x1xf32>
    %cst_12 = arith.constant 0.000000e+00 : f32
    %36 = vector.broadcast %cst_12 : f32 to vector<8x128xf32>
    %c0_13 = arith.constant 0 : index
    %c0_14 = arith.constant 0 : index
    %37 = vector.load %arg3[%c0_13, %c0_14] : memref<8x128xf32, #tpu.memory_space<vmem>>, vector<8x128xf32>
    tpu.vector_store %arg3[%c0_13, %c0_14], %36 {strides = array<i32>} : memref<8x128xf32, #tpu.memory_space<vmem>>, vector<8x128xf32>,
    %c0_15 = arith.constant 0 : index
    %c0_16 = arith.constant 0 : index
    %38 = vector.load %arg3[%c0_15, %c0_16] : memref<8x128xf32, #tpu.memory_space<vmem>>, vector<2x4xf32>
    tpu.vector_store %arg3[%c0_15, %c0_16], %11 {strides = array<i32>} : memref<8x128xf32, #tpu.memory_space<vmem>>, vector<2x4xf32>,
    %39 = tpu.bitcast %21 : vector<2x1xi32> -> vector<2x1xf32>
    %c0_17 = arith.constant 0 : index
    %c4 = arith.constant 4 : index
    %40 = vector.load %arg3[%c0_17, %c4] : memref<8x128xf32, #tpu.memory_space<vmem>>, vector<2x1xf32>
    tpu.vector_store %arg3[%c0_17, %c4], %39 {strides = array<i32>} : memref<8x128xf32, #tpu.memory_space<vmem>>, vector<2x1xf32>,
    %c0_18 = arith.constant 0 : index
    %c5 = arith.constant 5 : index
    %41 = vector.load %arg3[%c0_18, %c5] : memref<8x128xf32, #tpu.memory_space<vmem>>, vector<1x1xf32>
    tpu.vector_store %arg3[%c0_18, %c5], %35 {strides = array<i32>} : memref<8x128xf32, #tpu.memory_space<vmem>>, vector<1x1xf32>,
    return
  }
}

</mosaic_0001>

<llo_original>
// kernel: classification_head.1
$region0: #{classification_head.1}
  #allocation0 [shape = 'u32[]', space=smem, size = 0x4, offset = 0x4, fixed_abs, tag = 'smem constant byte address 0x4 - core index']
  #allocation1 [shape = 'u32[144,128]{1,0:T(1,128)}', space=vmem, size = 0x12000, scoped, tag = 'internal scratch']
  %s0 = inlined_call_operand.vmem [shape: f32[2,33], index: 0, kind: input, shape index: {}]
  %s1 = inlined_call_operand.vmem [shape: f32[33,4], index: 1, kind: input, shape index: {}]
  %s2 = inlined_call_operand.vmem [shape: s32[2,1], index: 2, kind: input, shape index: {}]
  %s3 = inlined_call_operand.vmem [shape: f32[8,128], index: 3, kind: output, shape index: {}]
  %s4 = sld [smem:[#allocation0]]
  $region22: #{classification_head.1} parent=0
    _
  %s6 = ssub.s32 1, %s4
  %s7 = scalar_select 0, %s6, %s4
  // Predicated region
  $region2: #{classification_head.1} parent=0 // pred_check
    _
  $region3: #{classification_head.1} parent=0 // pred_check_branch
    %9 = sbr.rel (0) target = $region5
  $region4: #{classification_head.1} parent=0 // pred_region
    _
  $region5: #{classification_head.1} parent=0 // pred_fallthru
    _
  // Predicated region
  $region6: #{classification_head.1} parent=0 // pred_check
    _
  $region7: #{classification_head.1} parent=0 // pred_check_branch
    %11 = sbr.rel (0) target = $region9
  $region8: #{classification_head.1} parent=0 // pred_region
    _
  $region9: #{classification_head.1} parent=0 // pred_fallthru
    _
  // Predicated region
  $region10: #{classification_head.1} parent=0 // pred_check
    _
  $region11: #{classification_head.1} parent=0 // pred_check_branch
    %13 = sbr.rel (0) target = $region13
  $region12: #{classification_head.1} parent=0 // pred_region
    _
  $region13: #{classification_head.1} parent=0 // pred_fallthru
    _
  %v14 = vld [vmem:[%s0] sm:$0x3]
  %v15 = vld [vmem:[%s1] sm:$0xff]
  %v16 = vld [vmem:[%s1 + $0x8] sm:$0xff]
  %v17 = vld [vmem:[%s1 + $0x10] sm:$0xff]
  %v18 = vld [vmem:[%s1 + $0x18] sm:$0xff]
  %v19 = vld [vmem:[%s1 + $0x20] sm:$0x1]
  %vm20 = vcmask 269312
  %v22 = vsel %vm20, %v14, 0
  %vm24 = vcmask 1040384
  %v26 = vsel %vm24, %v19, 0
  %28 = vmatprep.subr.mxu0 0.0
  %29 = vmatpush1.msra.mxu0 %v15
  %30 = vmatprep.subr.mxu0 0.0
  %31 = vmatpush1.msra.mxu0 %v16
  %32 = vmatprep.subr.mxu0 0.0
  %33 = vmatpush1.msra.mxu0 %v17
  %34 = vmatprep.subr.mxu0 0.0
  %35 = vmatpush1.msra.mxu0 %v18
  %36 = vmatprep.subr.mxu0 0.0
  %37 = vmatpush1.msra.mxu0 %v26
  %38 = vmatprep.subr.mxu0 0.0
  %39 = vmatpush1.msra.mxu0 0.0
  %40 = vmatprep.subr.mxu0 0.0
  %41 = vmatpush1.msra.mxu0 0.0
  %42 = vmatprep.subr.mxu0 0.0
  %43 = vmatpush1.msra.mxu0 0.0
  %44 = vmatprep.subr.mxu0 0.0
  %45 = vmatpush1.msra.mxu0 0.0
  %46 = vmatprep.subr.mxu0 0.0
  %47 = vmatpush1.msra.mxu0 0.0
  %48 = vmatprep.subr.mxu0 0.0
  %49 = vmatpush1.msra.mxu0 0.0
  %50 = vmatprep.subr.mxu0 0.0
  %51 = vmatpush1.msra.mxu0 0.0
  %52 = vmatprep.subr.mxu0 0.0
  %53 = vmatpush1.msra.mxu0 0.0
  %54 = vmatprep.subr.mxu0 0.0
  %55 = vmatpush1.msra.mxu0 0.0
  %56 = vmatprep.subr.mxu0 0.0
  %57 = vmatpush1.msra.mxu0 0.0
  %58 = vmatprep.subr.mxu0 0.0
  %59 = vmatpush1.msra.mxu0 0.0
  %60 = vmatprep.subr.mxu0 0.0
  %61 = vmatpush1.msra.mxu0 0.0
  %62 = vmatprep.subr.mxu0 0.0
  %63 = vmatpush1.msra.mxu0 0.0
  %64 = vmatprep.subr.mxu0 0.0
  %65 = vmatpush1.msra.mxu0 0.0
  %66 = vmatprep.subr.mxu0 0.0
  %67 = vmatpush1.msra.mxu0 0.0
  %68 = vmatprep.subr.mxu0 0.0
  %69 = vmatpush1.msra.mxu0 0.0
  %70 = vmatprep.subr.mxu0 0.0
  %71 = vmatpush1.msra.mxu0 0.0
  %72 = vmatprep.subr.mxu0 0.0
  %73 = vmatpush1.msra.mxu0 0.0
  %74 = vmatprep.subr.mxu0 0.0
  %75 = vmatpush1.msra.mxu0 0.0
  %76 = vmatprep.subr.mxu0 0.0
  %77 = vmatpush1.msra.mxu0 0.0
  %78 = vmatprep.subr.mxu0 0.0
  %79 = vmatpush1.msra.mxu0 0.0
  %80 = vmatprep.subr.mxu0 0.0
  %81 = vmatpush1.msra.mxu0 0.0
  %82 = vmatprep.subr.mxu0 0.0
  %83 = vmatpush1.msra.mxu0 0.0
  %84 = vmatprep.subr.mxu0 0.0
  %85 = vmatpush1.msra.mxu0 0.0
  %86 = vmatprep.subr.mxu0 0.0
  %87 = vmatpush1.msra.mxu0 0.0
  %88 = vmatprep.subr.mxu0 0.0
  %89 = vmatpush1.msra.mxu0 0.0
  %90 = vmatprep.subr.mxu0 0.0
  %91 = vmatpush1.msra.mxu0 0.0
  %92 = vmatprep.mubr.f32.mxu0 0.0
  %93 = vmatmul.mubr.f32.gmra.mrb[0].mxu0 %v22
  %v94 = vpop.f32.mrb[0].mxu0
  %v95 = vadd.f32 0.0, %v94
  %v96 = vpop.f32.mrb[0].mxu0
  %97 = vdwg.mxu0
  %vm98 = vcmask 25600
  %v99 = vsel %vm98, %v95, -inf
  %100 = vmax.xlane.f32.xlu0 %v99
  %v101 = vpop.xlane.xlu0 %100
  %v102 = vsub.f32 %v95, %v101
  %v103 = vmul.f32 %v102, 1.442695
  %v104 = vpow.pop %v103
  %v105 = vsel %vm98, %v104, 0.0
  %106 = vadd.xlane.f32.xlu0 %v105
  %v107 = vpop.xlane.xlu0 %106
  %v108 = vrcp.pop %v107
  %v109 = vmul.f32 %v104, %v108
  %v110 = vlog2.pop %v107
  %v111 = vmul.f32 %v110, 0.6931472
  %v112 = vsub.f32 %v102, %v111
  %v113 = vlaneseq
  %v114 = vand.u32 %v113, 127
  %vm115 = vcmp.eq.f32.partialorder %v95, %v101
  %v116 = vsel %vm115, %v114, 4
  %v117 = vsel %vm98, %v116, 2147483647
  %v118 = vand.u32 %v117, 65535
  %v119 = vshra.s32 %v117, 16
  %v120 = vcvt.s32.f32 %v118
  %v121 = vcvt.s32.f32 %v119
  %122 = vmin.xlane.f32.xlu0 %v121
  %v123 = vpop.xlane.xlu0 %122
  %vm124 = vcmp.eq.f32.partialorder %v121, %v123
  %v125 = vsel %vm124, %v120, inf
  %126 = vmin.xlane.f32.xlu0 %v125
  %v127 = vpop.xlane.xlu0 %126
  %v128 = vcvt.f32.s32 %v127
  %v129 = vcvt.f32.s32 %v123
  %v130 = vshll.u32 %v129, 16
  %v131 = vadd.s32 %v130, %v128
  %v132 = vld [vmem:[%s2] sm:$0x3]
  %133 = vset.pattern.permute.xlu0 0
  %134 = vperm.xlu0 %133, %v132
  %v135 = vpop.permute.xlu0 %134
  %vm136 = vcmp.eq.s32.totalorder %v114, %v135
  %v137 = vsel %vm136, 1, 0
  %v138 = vcvt.s32.f32 %v137
  %v139 = vmul.f32 %v138, %v112
  %v140 = vsel %vm98, %v139, 0.0
  %141 = vadd.xlane.f32.xlu0 %v140
  %v142 = vpop.xlane.xlu0 %141
  %v143 = vsub.f32 0.0, %v142
  %vm144 = vcmask 1041408
  %v145 = vsel %vm144, %v143, 0.0
  %v146 = vrot.slane %v145, 4
  %v147 = vadd.f32 %v145, %v146
  %v148 = vrot.slane %v147, 2
  %v149 = vadd.f32 %v147, %v148
  %v150 = vrot.slane %v149, 1
  %v151 = vadd.f32 %v149, %v150
  %v152 = vmul.f32 %v151, 0.5
  %153 = vst [vmem:[%s3] sm:$0xff] 0.0
  %154 = vst.msk [vmem:[%s3] sm:$0x3] %vm98, %v109
  %vm156 = vcmask 33824
  %157 = vst.msk [vmem:[%s3] sm:$0x3] %vm156, %v131
  %vm158 = vcmask 41000
  %159 = vst.msk [vmem:[%s3] sm:$0x1] %vm158, %v152
  // Predicated region
  $region14: #{classification_head.1} parent=0 // pred_check
    _
  $region15: #{classification_head.1} parent=0 // pred_check_branch
    %161 = sbr.rel (0) target = $region17
  $region16: #{classification_head.1} parent=0 // pred_region
    _
  $region17: #{classification_head.1} parent=0 // pred_fallthru
    _
  // Predicated region
  $region18: #{classification_head.1} parent=0 // pred_check
    _
  $region19: #{classification_head.1} parent=0 // pred_check_branch
    %163 = sbr.rel (0) target = $region21
  $region20: #{classification_head.1} parent=0 // pred_region
    _
  $region21: #{classification_head.1} parent=0 // pred_fallthru
    _

</llo_original>
